<compile_context>
chip_gen: v7x
topology: tpu7x:2x2x1
jax: 0.10.0
libtpu: 0.0.40
codegen_flags: <defaults>
</compile_context>

<pallas_src>
import functools

import jax
import jax.numpy as jnp
from jax.experimental import pallas as pl
from jax.experimental.pallas import tpu as pltpu


def _round_up(x, m):
    return (x + m - 1) // m * m


def _patch_embed_kernel(x_ref, w_ref, b_ref, o_ref):
    # x_ref: (TM, Kp), w_ref: (Kp, TE), b_ref: (1, TE), o_ref: (TM, TE)
    acc = jnp.dot(x_ref[...], w_ref[...], preferred_element_type=jnp.float32)
    o_ref[...] = (acc + b_ref[...]).astype(o_ref.dtype)


def _choose_tiles(M, Kp, Ep, in_bytes, w_bytes, out_bytes):
    """Pick (TM, TE). All Python ints (trace time)."""
    # Whole padded embed dim as one tile whenever the weight is a few MiB
    # (ViT-B: 768*768*4 ~= 2.25 MiB) -> weight/bias stay VMEM-resident.
    TE = Ep if Kp * Ep * w_bytes <= 8 * 1024 * 1024 else 512

    # Double-buffered per-step budget, with headroom under v7x's 64 MiB VMEM.
    budget = 40 * 1024 * 1024
    fixed = 2 * (Kp * TE + TE) * w_bytes              # weight + bias buffers
    per_row = 2 * (Kp * in_bytes + TE * out_bytes)    # patches in + out (x2)

    sub = 8 if in_bytes >= 4 else 16                  # sublane multiple
    tm = max(sub, min(2048, max(1, (budget - fixed) // per_row)))
    tm = max(sub, (tm // sub) * sub)
    # v7x: 2 TensorCores shard the parallel M axis -> keep >= 2 M steps by
    # shrinking TM instead of running one huge tile on a single core.
    if M > sub:
        tm = min(tm, _round_up(pl.cdiv(M, 2), sub))
    tm = min(tm, _round_up(M, sub))
    return tm, TE


@functools.partial(
    jax.jit, static_argnames=("patch_size", "embed_dim", "compute_dtype"))
def patch_embed_forward(x, w_mat, b_mat, *, patch_size, embed_dim,
                        compute_dtype=None):
    """x: (B,C,H,W) NCHW; w_mat: (Kp, Ep); b_mat: (1, Ep) -> (B, N, embed_dim)."""
    B, C, H, W = x.shape
    P = patch_size
    Hp, Wp = H // P, W // P
    N = Hp * Wp
    M = B * N
    K = C * P * P
    Kp, Ep = w_mat.shape

    cdt = x.dtype if compute_dtype is None else jnp.dtype(compute_dtype)
    # Cast *before* the patchify so any HBM-resident intermediate is already
    # narrow (the op is HBM-bound at f32 on v6e/v7x).
    xc = x.astype(cdt)

    # Patchify: (B,C,Hp,P,Wp,P) -> (B,Hp,Wp,C,P,P) -> (M, K).  Inner (C,P,P)
    # ordering matches the Conv2d weight flattening done at init.
    patches = xc.reshape(B, C, Hp, P, Wp, P)
    patches = jnp.transpose(patches, (0, 2, 4, 1, 3, 5)).reshape(M, K)
    if Kp != K:
        patches = jnp.pad(patches, ((0, 0), (0, Kp - K)))  # exact: zero cols

    w = w_mat.astype(cdt)   # match patches dtype (avoid mixed-dtype dot)
    b = b_mat               # f32, added to the f32 accumulator

    out_dtype = x.dtype
    in_bytes = jnp.dtype(cdt).itemsize
    w_bytes = in_bytes
    out_bytes = jnp.dtype(out_dtype).itemsize

    TM, TE = _choose_tiles(M, Kp, Ep, in_bytes, w_bytes, out_bytes)
    m_tiles = pl.cdiv(M, TM)
    e_tiles = pl.cdiv(Ep, TE)

    # VMEM limit from the *chosen* tiles/dtypes, capped at 48 MiB so the
    # compiler keeps scratch headroom on v7x's 64 MiB physical VMEM.
    step_bytes = (2 * TM * Kp * in_bytes            # patches (double-buffered)
                  + 2 * Kp * TE * w_bytes           # weight buffers
                  + 2 * TE * b.dtype.itemsize       # bias buffers
                  + 2 * TM * TE * out_bytes)        # output buffers
    vmem_limit = int(min(max(step_bytes + (4 << 20), 8 << 20), 48 << 20))

    cost = pl.CostEstimate(
        flops=2 * M * Kp * Ep,
        transcendentals=0,
        bytes_accessed=(e_tiles * M * Kp * in_bytes   # activations per E tile
                        + Kp * Ep * w_bytes           # weight: once per E tile
                        + Ep * b.dtype.itemsize
                        + M * Ep * out_bytes),
    )

    out = pl.pallas_call(
        _patch_embed_kernel,
        out_shape=jax.ShapeDtypeStruct((M, Ep), out_dtype),
        grid_spec=pl.GridSpec(
            # E outer / M inner: the (Kp, TE) weight block index is constant
            # across the whole inner M sweep -> DMA'd once per E tile and kept
            # VMEM-resident (e_tiles == 1 for typical ViT dims).
            grid=(e_tiles, m_tiles),
            in_specs=[
                pl.BlockSpec((TM, Kp), lambda e, m: (m, 0)),
                pl.BlockSpec((Kp, TE), lambda e, m: (0, e)),  # M-invariant
                pl.BlockSpec((1, TE), lambda e, m: (0, e)),   # M-invariant
            ],
            out_specs=pl.BlockSpec((TM, TE), lambda e, m: (m, e)),
        ),
        compiler_params=pltpu.CompilerParams(
            dimension_semantics=("parallel", "parallel"),
            vmem_limit_bytes=vmem_limit,
            allow_input_fusion=[True, False, False],
        ),
        cost_estimate=cost,
    )(patches, w, b)

    # Drop lane padding of the embed dim, reshape to (B, N, E).
    return out[:, :embed_dim].reshape(B, N, embed_dim)


class PatchEmbedPallas:
    def __init__(self, img_size=16, patch_size=4, in_chans=4, embed_dim=32,
                 key=jax.random.PRNGKey(0)):
        self.img_size = (img_size, img_size)
        self.patch_size = (patch_size, patch_size)
        self.num_patches = (img_size // patch_size) * (img_size // patch_size)
        self.in_chans = in_chans
        self.embed_dim = embed_dim

        k_w, k_b = jax.random.split(key)
        fan_in = in_chans * patch_size * patch_size
        bound = 1.0 / jnp.sqrt(fan_in)
        # Deterministic init (uniform, same bounds as PyTorch Conv2d default).
        self.weight = jax.random.uniform(
            k_w, (embed_dim, in_chans, patch_size, patch_size),
            minval=-bound, maxval=bound, dtype=jnp.float32)
        self.bias = jax.random.uniform(
            k_b, (embed_dim,), minval=-bound, maxval=bound, dtype=jnp.float32)

        # Hoisted (once, not per forward): Conv2d weight (E,C,P,P) -> dense
        # (Kp, Ep), bias -> (1, Ep).  E padded to a lane-dense multiple of 128
        # (unmasked vst), K padded to a multiple of 128 (lane-dense LHS /
        # full MXU contraction depth).  Padding is zeros -> exact; the E
        # padding is sliced off after the kernel.
        K = in_chans * patch_size * patch_size
        Kp = _round_up(K, 128)
        Ep = _round_up(embed_dim, 128)
        w_mat = self.weight.reshape(embed_dim, K).T             # (K, E)
        w_mat = jnp.pad(w_mat, ((0, Kp - K), (0, Ep - embed_dim)))
        b_mat = jnp.pad(self.bias.reshape(1, embed_dim),
                        ((0, 0), (0, Ep - embed_dim)))
        self.w_mat = w_mat
        self.b_mat = b_mat

    def __call__(self, x, compute_dtype=None):
        B, C, H, W = x.shape
        assert H == self.img_size[0] and W == self.img_size[1], (
            f"Input image size ({H}*{W}) doesn't match model "
            f"({self.img_size[0]}*{self.img_size[1]}).")
        return patch_embed_forward(
            x, self.w_mat, self.b_mat,
            patch_size=self.patch_size[0],
            embed_dim=self.embed_dim,
            compute_dtype=compute_dtype)


if __name__ == "__main__":
    key = jax.random.PRNGKey(0)
    k_x, k_params = jax.random.split(key)

    B, C, H, W = 2, 4, 16, 16
    patch_size, embed_dim = 4, 32

    x = jax.random.normal(k_x, (B, C, H, W), dtype=jnp.float32)

    model = PatchEmbedPallas(img_size=H, patch_size=patch_size,
                             in_chans=C, embed_dim=embed_dim, key=k_params)

    out = jax.block_until_ready(model(x))

    # Reference: lax conv (same semantics as nn.Conv2d stride=P) + flatten/T.
    ref = jax.lax.conv_general_dilated(
        x, model.weight,
        window_strides=(patch_size, patch_size), padding="VALID",
        dimension_numbers=("NCHW", "OIHW", "NCHW"))
    ref = ref + model.bias.reshape(1, embed_dim, 1, 1)
    ref = ref.reshape(B, embed_dim, -1).transpose(0, 2, 1)

    assert out.shape == (B, model.num_patches, embed_dim), out.shape
    assert jnp.allclose(out, ref, atol=1e-4, rtol=1e-4)

    # bf16 MXU fast path (bf16 I/O, f32 accumulate) — looser tolerance.
    out_bf16 = jax.block_until_ready(model(x, compute_dtype=jnp.bfloat16))
    assert out_bf16.shape == (B, model.num_patches, embed_dim)
    assert jnp.allclose(out_bf16, ref, atol=5e-2, rtol=5e-2)

    print("KERNEL_OK")
</pallas_src>

<mosaic_0001>
module attributes {stable_mosaic.version = 11 : i64} {
  func.func @_patch_embed_kernel(%arg0: i32, %arg1: i32, %arg2: memref<16x128xf32, #tpu.memory_space<vmem>>, %arg3: memref<128x128xf32, #tpu.memory_space<vmem>>, %arg4: memref<1x128xf32, #tpu.memory_space<vmem>>, %arg5: memref<16x128xf32, #tpu.memory_space<vmem>>) attributes {dimension_semantics = [#tpu.dimension_semantics<parallel>, #tpu.dimension_semantics<parallel>], iteration_bounds = array<i64: 1, 2>, scalar_prefetch = 0 : i64, scratch_operands = 0 : i64, tpu.core_type = #tpu.core_type<tc>, window_params = [{transform_indices = @transform_0, window_bounds = array<i64: 16, 128>}, {transform_indices = @transform_1, window_bounds = array<i64: 128, 128>}, {transform_indices = @transform_2, window_bounds = array<i64: 1, 128>}, {transform_indices = @transform_3, window_bounds = array<i64: 16, 128>}]} {
    %c0 = arith.constant 0 : index
    %c0_0 = arith.constant 0 : index
    %0 = vector.load %arg2[%c0, %c0_0] : memref<16x128xf32, #tpu.memory_space<vmem>>, vector<16x128xf32>
    %c0_1 = arith.constant 0 : index
    %c0_2 = arith.constant 0 : index
    %1 = vector.load %arg3[%c0_1, %c0_2] : memref<128x128xf32, #tpu.memory_space<vmem>>, vector<128x128xf32>
    %cst = arith.constant dense<0.000000e+00> : vector<16x128xf32>
    %2 = tpu.matmul %0, %1, %cst {dimension_numbers = #tpu.dot_dimension_numbers<[1], [0], [0], [1], [0, 0, 1, 1], [], []>} : vector<16x128xf32>, vector<128x128xf32>, vector<16x128xf32> -> vector<16x128xf32>
    %c0_3 = arith.constant 0 : index
    %c0_4 = arith.constant 0 : index
    %3 = vector.load %arg4[%c0_3, %c0_4] : memref<1x128xf32, #tpu.memory_space<vmem>>, vector<1x128xf32>
    %4 = vector.broadcast %3 : vector<1x128xf32> to vector<16x128xf32>
    %5 = arith.addf %2, %4 : vector<16x128xf32>
    %c0_5 = arith.constant 0 : index
    %c0_6 = arith.constant 0 : index
    %6 = vector.load %arg5[%c0_5, %c0_6] : memref<16x128xf32, #tpu.memory_space<vmem>>, vector<16x128xf32>
    tpu.vector_store %arg5[%c0_5, %c0_6], %5 {strides = array<i32>} : memref<16x128xf32, #tpu.memory_space<vmem>>, vector<16x128xf32>,
    return
  }
  func.func @transform_0(%arg0: i32, %arg1: i32) -> (i32, i32) {
    %c0_i32 = arith.constant 0 : i32
    %c0_i32_0 = arith.constant 0 : i32
    return %arg1, %c0_i32 : i32, i32
  }
  func.func @transform_1(%arg0: i32, %arg1: i32) -> (i32, i32) {
    %c0_i32 = arith.constant 0 : i32
    %c0_i32_0 = arith.constant 0 : i32
    return %c0_i32, %arg0 : i32, i32
  }
  func.func @transform_2(%arg0: i32, %arg1: i32) -> (i32, i32) {
    %c0_i32 = arith.constant 0 : i32
    %c0_i32_0 = arith.constant 0 : i32
    return %c0_i32, %arg0 : i32, i32
  }
  func.func @transform_3(%arg0: i32, %arg1: i32) -> (i32, i32) {
    %c0_i32 = arith.constant 0 : i32
    return %arg1, %arg0 : i32, i32
  }
}

</mosaic_0001>

<llo_original>
// kernel: patch_embed_forward.2
$region0: #{patch_embed_forward.2}
  #allocation0 [shape = 'u32[]', space=smem, size = 0x4, offset = 0x4, fixed_abs, tag = 'smem constant byte address 0x4 - core index']
  #allocation1 [shape = 'u32[144,128]{1,0:T(1,128)}', space=vmem, size = 0x12000, scoped, tag = 'internal scratch']
  #allocation2 [shape = 'u32[2048]{0}', space=vmem, size = 0x2000, scoped, tag = 'scoped memory for patch_embed_forward.2']
  #allocation3 [shape = 'u32[2048]{0}', space=vmem, size = 0x2000, scoped, tag = 'scoped memory for patch_embed_forward.2']
  #allocation4 [shape = 'u32[2048]{0}', space=vmem, size = 0x2000, scoped, tag = 'scoped memory for patch_embed_forward.2']
  #allocation5 [shape = 'u32[2048]{0}', space=vmem, size = 0x2000, scoped, tag = 'scoped memory for patch_embed_forward.2']
  #allocation6 [shape = 'u32[2048]{0}', space=vmem, size = 0x2000, scoped, tag = 'scoped memory for patch_embed_forward.2']
  %s0 = inlined_call_operand.vmem [shape: f32[128,128], index: 0, kind: input, shape index: {}]
  %s1 = inlined_call_operand.vmem [shape: f32[1,128], index: 1, kind: input, shape index: {}]
  %s2 = inlined_call_operand.vmem [shape: f32[32,64], index: 2, kind: input, shape index: {}]
  %s3 = inlined_call_operand.<no memory space> [shape: f32[], index: 3, kind: input, shape index: {}]
  %s4 = inlined_call_operand.hbm [shape: f32[32,128], index: 4, kind: output, shape index: {}]
  %s5 = sld [smem:[#allocation0]]
  $region45: #{patch_embed_forward.2} parent=0
    _
  %s7 = ssub.s32 1, %s5
  %s8 = scalar_select 0, %s7, %s5
  %v9 = vstv %s3
  $region1: #{patch_embed_forward.2} parent=0
    #allocation7 [shape = 'u8[16384]{0}', space=vmem, size = 0x4000, scoped, tag = 'output window, operand 0']
    #allocation8 [shape = 's32[2]{0}', space=sflag, size = 0x8, scoped, tag = 'scoped memory for patch_embed_forward.2']
    %10 = vsyncpa [#allocation8], 0
    %s11 = scalar_lea.sflag [#allocation8], 1
    %12 = vsyncpa %s11, 0
    loop: start=0, step=1, limit=4
    $region2: #{patch_embed_forward.2} parent=1 // loop_pre_header
      _
    $region3: #{patch_embed_forward.2} parent=1 // loop_header
      %s14 = sphi 0, %s18
      %p15 = scmp.ge.s32.totalorder %s14, 4
      %s21 = sphi 0, %s33
      %s22 = sphi 0, %s29
      %s23 = sphi 0, %s21
      %s24 = sphi 0, %s22
      %s25 = sphi 0, %s23
      %s26 = sphi 0, %s24
      %s36 = sphi 0, %s38
      %s39 = sphi 0, %s36
      %s40 = sphi 0, %s39
      %s56 = sphi 0, %s40
      %s62 = sphi 0, %s64
      %s65 = sphi 0, %s62
      %s66 = sphi 0, %s65
      %s82 = sphi 0, %s66
      %s88 = sphi 0, %s90
      %s91 = sphi 0, %s88
      %s92 = sphi 0, %s91
      %s108 = sphi 0, %s92
      %s116 = sphi 0, %s118
      %s119 = sphi 0, %s116
      %s120 = sphi 0, %s119
      %s136 = sphi 0, %s120
    $region4: #{patch_embed_forward.2} parent=1 // loop_header_branch
      %17 = sbr.rel (%p15) target = $region8
    $region5: #{patch_embed_forward.2} parent=1 // loop_body
      %s19 = ssub.s32 %s14, 1
      %s20 = ssub.s32 %s14, 2
      %s27 = sadd.s32 1, %s22
      %p28 = scmp.ge.s32.totalorder %s27, 2
      %s29 = scalar_select %p28, 0, %s27
      %s30 = sadd.s32 1, %s21
      %s31 = scalar_select %p28, %s30, %s21
      %p32 = scmp.ge.s32.totalorder %s31, 1
      %s33 = scalar_select %p32, 0, %s31
      %s34 = ssub.s32 %s22, %s29
      %p35 = scmp.eq.s32.totalorder %s34, 0
      %s37 = sadd.s32 %s36, 1
      %s38 = scalar_select %p35, %s36, %s37
      %p41 = pneg %p35
      %p42 = scmp.eq.s32.totalorder %s14, 1
      %p43 = por %p41, %p42
      %p44 = scmp.ne.s32.totalorder %s36, %s39
      %p45 = scmp.eq.s32.totalorder %s14, 0
      %p46 = por %p44, %p45
      %p47 = scmp.ne.s32.totalorder %s36, %s39
      %p48 = scmp.eq.s32.totalorder %s19, 1
      %p49 = por %p47, %p48
      %p50 = scmp.ne.s32.totalorder %s39, %s40
      %p51 = scmp.eq.s32.totalorder %s19, 0
      %p52 = por %p50, %p51
      %p53 = scmp.ne.s32.totalorder %s39, %s40
      %p54 = scmp.eq.s32.totalorder %s20, 1
      %p55 = por %p53, %p54
      %p57 = scmp.ne.s32.totalorder %s40, %s56
      %p58 = scmp.eq.s32.totalorder %s20, 0
      %p59 = por %p57, %p58
      %s60 = ssub.s32 %s21, %s33
      %p61 = scmp.eq.s32.totalorder %s60, 0
      %s63 = sadd.s32 %s62, 1
      %s64 = scalar_select %p61, %s62, %s63
      %p67 = pneg %p61
      %p68 = scmp.eq.s32.totalorder %s14, 1
      %p69 = por %p67, %p68
      %p70 = scmp.ne.s32.totalorder %s62, %s65
      %p71 = scmp.eq.s32.totalorder %s14, 0
      %p72 = por %p70, %p71
      %p73 = scmp.ne.s32.totalorder %s62, %s65
      %p74 = scmp.eq.s32.totalorder %s19, 1
      %p75 = por %p73, %p74
      %p76 = scmp.ne.s32.totalorder %s65, %s66
      %p77 = scmp.eq.s32.totalorder %s19, 0
      %p78 = por %p76, %p77
      %p79 = scmp.ne.s32.totalorder %s65, %s66
      %p80 = scmp.eq.s32.totalorder %s20, 1
      %p81 = por %p79, %p80
      %p83 = scmp.ne.s32.totalorder %s66, %s82
      %p84 = scmp.eq.s32.totalorder %s20, 0
      %p85 = por %p83, %p84
      %s86 = ssub.s32 %s21, %s33
      %p87 = scmp.eq.s32.totalorder %s86, 0
      %s89 = sadd.s32 %s88, 1
      %s90 = scalar_select %p87, %s88, %s89
      %p93 = pneg %p87
      %p94 = scmp.eq.s32.totalorder %s14, 1
      %p95 = por %p93, %p94
      %p96 = scmp.ne.s32.totalorder %s88, %s91
      %p97 = scmp.eq.s32.totalorder %s14, 0
      %p98 = por %p96, %p97
      %p99 = scmp.ne.s32.totalorder %s88, %s91
      %p100 = scmp.eq.s32.totalorder %s19, 1
      %p101 = por %p99, %p100
      %p102 = scmp.ne.s32.totalorder %s91, %s92
      %p103 = scmp.eq.s32.totalorder %s19, 0
      %p104 = por %p102, %p103
      %p105 = scmp.ne.s32.totalorder %s91, %s92
      %p106 = scmp.eq.s32.totalorder %s20, 1
      %p107 = por %p105, %p106
      %p109 = scmp.ne.s32.totalorder %s92, %s108
      %p110 = scmp.eq.s32.totalorder %s20, 0
      %p111 = por %p109, %p110
      %s112 = ssub.s32 %s22, %s29
      %s113 = ssub.s32 %s21, %s33
      %s114 = sor.u32 %s112, %s113
      %p115 = scmp.eq.s32.totalorder %s114, 0
      %s117 = sadd.s32 %s116, 1
      %s118 = scalar_select %p115, %s116, %s117
      %p121 = pneg %p115
      %p122 = scmp.eq.s32.totalorder %s14, 1
      %p123 = por %p121, %p122
      %p124 = scmp.ne.s32.totalorder %s116, %s119
      %p125 = scmp.eq.s32.totalorder %s14, 0
      %p126 = por %p124, %p125
      %p127 = scmp.ne.s32.totalorder %s116, %s119
      %p128 = scmp.eq.s32.totalorder %s19, 1
      %p129 = por %p127, %p128
      %p130 = scmp.ne.s32.totalorder %s119, %s120
      %p131 = scmp.eq.s32.totalorder %s19, 0
      %p132 = por %p130, %p131
      %p133 = scmp.ne.s32.totalorder %s119, %s120
      %p134 = scmp.eq.s32.totalorder %s20, 1
      %p135 = por %p133, %p134
      %p137 = scmp.ne.s32.totalorder %s120, %s136
      %p138 = scmp.eq.s32.totalorder %s20, 0
      %p139 = por %p137, %p138
      %p140 = scmp.le.s32.totalorder 1, %s14
      %p141 = scmp.lt.s32.totalorder %s14, 3
      %p142 = pnand %p140, %p141
      %p143 = pneg %p142
      // Predicated region
      $region9: #{patch_embed_forward.2} parent=5 // pred_check
        _
      $region10: #{patch_embed_forward.2} parent=5 // pred_check_branch
        %145 = sbr.rel (%p142) target = $region12
      $region11: #{patch_embed_forward.2} parent=5 // pred_region
        %s146 = ssub.s32 %s14, 1
        // Predicated region
        $region13: #{patch_embed_forward.2} parent=11 // pred_check
          %p147 = pneg %p78
        $region14: #{patch_embed_forward.2} parent=11 // pred_check_branch
          %149 = sbr.rel (%p147) target = $region16
        $region15: #{patch_embed_forward.2} parent=11 // pred_region
          %p150 = scmp.lt.s32.totalorder %s23, 0
          %s151 = scalar_select %p150, %s23, 0
          %s152 = smul.addr %s151, 8
          %s153 = scalar_lea.vmem %s0, %s152
        $region16: #{patch_embed_forward.2} parent=11 // pred_fallthru
          _
        // Predicated region
        $region17: #{patch_embed_forward.2} parent=11 // pred_check
          %p154 = pneg %p104
        $region18: #{patch_embed_forward.2} parent=11 // pred_check_branch
          %156 = sbr.rel (%p154) target = $region20
        $region19: #{patch_embed_forward.2} parent=11 // pred_region
          %p157 = scmp.lt.s32.totalorder %s23, 0
          %s158 = scalar_select %p157, %s23, 0
          %s159 = scalar_lea.vmem %s1, %s158
        $region20: #{patch_embed_forward.2} parent=11 // pred_fallthru
          _
      $region12: #{patch_embed_forward.2} parent=5 // pred_fallthru
        _
      %p160 = scmp.lt.s32.totalorder %s14, 2
      // Predicated region
      $region21: #{patch_embed_forward.2} parent=5 // pred_check
        %p161 = pneg %p160
      $region22: #{patch_embed_forward.2} parent=5 // pred_check_branch
        %163 = sbr.rel (%p161) target = $region24
      $region23: #{patch_embed_forward.2} parent=5 // pred_region
        // Predicated region
        $region25: #{patch_embed_forward.2} parent=23 // pred_check
          %p164 = pneg %p46
        $region26: #{patch_embed_forward.2} parent=23 // pred_check_branch
          %166 = sbr.rel (%p164) target = $region28
        $region27: #{patch_embed_forward.2} parent=23 // pred_region
          %s167 = smul.u32 2, %s22
          %p168 = scmp.lt.s32.totalorder %s167, 3
          %s169 = scalar_select %p168, %s167, 3
          %s170 = smul.addr %s169, 8
          %s171 = scalar_lea.vmem %s2, %s170
          %s172 = smul.u32 2, %s22
        $region28: #{patch_embed_forward.2} parent=23 // pred_fallthru
          _
      $region24: #{patch_embed_forward.2} parent=5 // pred_fallthru
        _
      %p173 = scmp.le.s32.totalorder 1, %s14
      %p174 = scmp.lt.s32.totalorder %s14, 3
      %p175 = pnand %p173, %p174
      %p176 = pneg %p175
      // Predicated region
      $region29: #{patch_embed_forward.2} parent=5 // pred_check
        _
      $region30: #{patch_embed_forward.2} parent=5 // pred_check_branch
        %178 = sbr.rel (%p175) target = $region32
      $region31: #{patch_embed_forward.2} parent=5 // pred_region
        #allocation9 [shape = 'u8[8192]{0}', space=vmem, size = 0x2000, dematerialized = true, scoped, tag = 'FusionAdapter Buffer %fusion.1 = f32[32,128]{1,0:T(8,128)} fusion(%param_2.1, %param_3), kind=kLoop, calls=%fused_computation.2.clone, metadata={op_name="jit(patch_embed_forward)/jit(_pad)/pad" stack_frame_id=10}']
        %s179 = ssub.s32 %s14, 1
        %s180 = smul.u32 2, %s24
        %p181 = scmp.lt.s32.totalorder %s180, 3
        %s182 = scalar_select %p181, %s180, 3
        %s183 = smul.addr %s182, 8
        %s184 = scalar_lea.vmem %s2, %s183
        %p185 = pneg %p52
        %p186 = pneg %p49
        %p187 = scmp.lt.s32.totalorder %s23, 0
        %s188 = scalar_select %p187, %s23, 0
        %s189 = smul.addr %s188, 8
        %s190 = scalar_lea.vmem %s0, %s189
        %p191 = pneg %p78
        %p192 = pneg %p75
        %p193 = scmp.lt.s32.totalorder %s23, 0
        %s194 = scalar_select %p193, %s23, 0
        %s195 = scalar_lea.vmem %s1, %s194
        %p196 = pneg %p104
        %p197 = pneg %p101
        %p198 = pneg %p132
        %p199 = pneg %p129
        %s200 = sand.u32 %s119, 1
        %s201 = scalar_lea.sflag [#allocation8], %s200
        %s202 = sand.u32 %s119, 1
        %s203 = smul.addr %s202, 16
        %s204 = scalar_lea.vmem [#allocation7], %s203
        %s205 = smul.u32 2, %s24
        %p206 = scmp.lt.s32.totalorder %s205, 3
        %s207 = scalar_select %p206, %s205, 3
        %s208 = smul.addr %s207, 8
        %s209 = scalar_lea.vmem %s2, %s208
        %s210 = smul.u32 2, %s24
        %p211 = scmp.lt.s32.totalorder %s23, 0
        %s212 = scalar_select %p211, %s23, 0
        %s213 = smul.addr %s212, 8
        %s214 = scalar_lea.vmem %s0, %s213
        %p215 = scmp.lt.s32.totalorder %s23, 0
        %s216 = scalar_select %p215, %s23, 0
        %s217 = scalar_lea.vmem %s1, %s216
        %s218 = smul.u32 2, %s24
        %v219 = vld [vmem:[%s209] sm:$0xff]
        %v220 = vlaneseq
        %v221 = vand.u32 %v220, 127
        %vm223 = vcmp.lt.s32.totalorder %v221, 64
        %v224 = vsel %vm223, %v219, %v9
        %226 = vst [vmem:[#allocation9] sm:$0xff] %v224
        %s227 = scalar_lea.vmem %s209, 8
        %v228 = vld [vmem:[%s227] sm:$0xff]
        %v229 = vlaneseq
        %v230 = vand.u32 %v229, 127
        %vm232 = vcmp.lt.s32.totalorder %v230, 64
        %v233 = vsel %vm232, %v228, %v9
        %s234 = scalar_lea.vmem [#allocation9], 8
        %236 = vst [vmem:[%s234] sm:$0xff] %v233
        %v237 = vld [vmem:[#allocation9] sm:$0xff]
        %v238 = vld [vmem:[#allocation9 + $0x8] sm:$0xff]
        %v239 = vld [vmem:[%s214] sm:$0xff]
        %v240 = vld [vmem:[%s214 + $0x8] sm:$0xff]
        %v241 = vld [vmem:[%s214 + $0x10] sm:$0xff]
        %v242 = vld [vmem:[%s214 + $0x18] sm:$0xff]
        %v243 = vld [vmem:[%s214 + $0x20] sm:$0xff]
        %v244 = vld [vmem:[%s214 + $0x28] sm:$0xff]
        %v245 = vld [vmem:[%s214 + $0x30] sm:$0xff]
        %v246 = vld [vmem:[%s214 + $0x38] sm:$0xff]
        %v247 = vld [vmem:[%s214 + $0x40] sm:$0xff]
        %v248 = vld [vmem:[%s214 + $0x48] sm:$0xff]
        %v249 = vld [vmem:[%s214 + $0x50] sm:$0xff]
        %v250 = vld [vmem:[%s214 + $0x58] sm:$0xff]
        %v251 = vld [vmem:[%s214 + $0x60] sm:$0xff]
        %v252 = vld [vmem:[%s214 + $0x68] sm:$0xff]
        %v253 = vld [vmem:[%s214 + $0x70] sm:$0xff]
        %v254 = vld [vmem:[%s214 + $0x78] sm:$0xff]
        %v255 = vld [vmem:[%s217] sm:$0x1]
        %v257 = vlaneseq
        %v258 = vshrl.u32 %v257, 7
        %v259 = vsub.s32 0, %v258
        %v260 = vrot.slane %v255, %v259
        %262 = vmatprep.subr.mxu0 0.0
        %263 = vmatpush1.msra.mxu0 %v239
        %264 = vmatprep.subr.mxu0 0.0
        %265 = vmatpush1.msra.mxu0 %v240
        %266 = vmatprep.subr.mxu0 0.0
        %267 = vmatpush1.msra.mxu0 %v241
        %268 = vmatprep.subr.mxu0 0.0
        %269 = vmatpush1.msra.mxu0 %v242
        %270 = vmatprep.subr.mxu0 0.0
        %271 = vmatpush1.msra.mxu0 %v243
        %272 = vmatprep.subr.mxu0 0.0
        %273 = vmatpush1.msra.mxu0 %v244
        %274 = vmatprep.subr.mxu0 0.0
        %275 = vmatpush1.msra.mxu0 %v245
        %276 = vmatprep.subr.mxu0 0.0
        %277 = vmatpush1.msra.mxu0 %v246
        %278 = vmatprep.subr.mxu0 0.0
        %279 = vmatpush1.msra.mxu0 %v247
        %280 = vmatprep.subr.mxu0 0.0
        %281 = vmatpush1.msra.mxu0 %v248
        %282 = vmatprep.subr.mxu0 0.0
        %283 = vmatpush1.msra.mxu0 %v249
        %284 = vmatprep.subr.mxu0 0.0
        %285 = vmatpush1.msra.mxu0 %v250
        %286 = vmatprep.subr.mxu0 0.0
        %287 = vmatpush1.msra.mxu0 %v251
        %288 = vmatprep.subr.mxu0 0.0
        %289 = vmatpush1.msra.mxu0 %v252
        %290 = vmatprep.subr.mxu0 0.0
        %291 = vmatpush1.msra.mxu0 %v253
        %292 = vmatprep.subr.mxu0 0.0
        %293 = vmatpush1.msra.mxu0 %v254
        %294 = vmatprep.subr.mxu0 0.0
        %295 = vmatpush1.msra.mxu0 0.0
        %296 = vmatprep.subr.mxu0 0.0
        %297 = vmatpush1.msra.mxu0 0.0
        %298 = vmatprep.subr.mxu0 0.0
        %299 = vmatpush1.msra.mxu0 0.0
        %300 = vmatprep.subr.mxu0 0.0
        %301 = vmatpush1.msra.mxu0 0.0
        %302 = vmatprep.subr.mxu0 0.0
        %303 = vmatpush1.msra.mxu0 0.0
        %304 = vmatprep.subr.mxu0 0.0
        %305 = vmatpush1.msra.mxu0 0.0
        %306 = vmatprep.subr.mxu0 0.0
        %307 = vmatpush1.msra.mxu0 0.0
        %308 = vmatprep.subr.mxu0 0.0
        %309 = vmatpush1.msra.mxu0 0.0
        %310 = vmatprep.subr.mxu0 0.0
        %311 = vmatpush1.msra.mxu0 0.0
        %312 = vmatprep.subr.mxu0 0.0
        %313 = vmatpush1.msra.mxu0 0.0
        %314 = vmatprep.subr.mxu0 0.0
        %315 = vmatpush1.msra.mxu0 0.0
        %316 = vmatprep.subr.mxu0 0.0
        %317 = vmatpush1.msra.mxu0 0.0
        %318 = vmatprep.subr.mxu0 0.0
        %319 = vmatpush1.msra.mxu0 0.0
        %320 = vmatprep.subr.mxu0 0.0
        %321 = vmatpush1.msra.mxu0 0.0
        %322 = vmatprep.subr.mxu0 0.0
        %323 = vmatpush1.msra.mxu0 0.0
        %324 = vmatprep.subr.mxu0 0.0
        %325 = vmatpush1.msra.mxu0 0.0
        %326 = vmatprep.mubr.f32.mxu0 0.0
        %327 = vmatmul.mubr.f32.gmra.mrb[0].mxu0 %v237
        %v328 = vpop.f32.mrb[0].mxu0
        %v329 = vadd.f32 %v260, %v328
        %v330 = vpop.f32.mrb[0].mxu0
        %331 = vmatprep.mubr.f32.mxu0 0.0
        %332 = vmatmul.mubr.f32.gmra.mrb[0].mxu0 %v238
        %v333 = vpop.f32.mrb[0].mxu0
        %v334 = vadd.f32 %v260, %v333
        %v335 = vpop.f32.mrb[0].mxu0
        %336 = vdwg.mxu0
        %337 = vst [vmem:[%s204] sm:$0xff] %v329
        %338 = vst [vmem:[%s204 + $0x8] sm:$0xff] %v334
        %s339 = sand.u32 %s119, 1
        %s340 = scalar_lea.sflag [#allocation8], %s339
        %s341 = sand.u32 %s119, 1
        %s342 = smul.addr %s341, 16
        %s343 = scalar_lea.vmem [#allocation7], %s342
        // Predicated region
        $region33: #{patch_embed_forward.2} parent=31 // pred_check
          %p344 = pneg %p129
        $region34: #{patch_embed_forward.2} parent=31 // pred_check_branch
          %346 = sbr.rel (%p344) target = $region36
        $region35: #{patch_embed_forward.2} parent=31 // pred_region
          %s347 = smul.u32 2, %s24
          %s349 = ssub.s32 256, 256
          %350 = vsyncadd %s340, %s349
          %s351 = sadd.s32 %s23, %s347
          %s352 = smul.addr %s351, 128
          %s353 = scalar_lea.hbm %s4, %s352
          %s354 = sshll.u32 %s343, 4
          %s355 = int_to_ptr.vmem [resolvable:$true] %s354
          %360 = dma.vmem_to_hbm [thread:$0]  %s355, 256, %s353, %s340, 128, 128, 8
        $region36: #{patch_embed_forward.2} parent=31 // pred_fallthru
          _
      $region32: #{patch_embed_forward.2} parent=5 // pred_fallthru
        _
      %p361 = scmp.le.s32.totalorder 2, %s14
      // Predicated region
      $region37: #{patch_embed_forward.2} parent=5 // pred_check
        %p362 = pneg %p361
      $region38: #{patch_embed_forward.2} parent=5 // pred_check_branch
        %364 = sbr.rel (%p362) target = $region40
      $region39: #{patch_embed_forward.2} parent=5 // pred_region
        %s365 = ssub.s32 %s14, 2
        // Predicated region
        $region41: #{patch_embed_forward.2} parent=39 // pred_check
          %p366 = pneg %p135
        $region42: #{patch_embed_forward.2} parent=39 // pred_check_branch
          %368 = sbr.rel (%p366) target = $region44
        $region43: #{patch_embed_forward.2} parent=39 // pred_region
          %s369 = sand.u32 %s120, 1
          %s370 = scalar_lea.sflag [#allocation8], %s369
          %s371 = sand.u32 %s120, 1
          %s372 = smul.addr %s371, 16
          %s373 = scalar_lea.vmem [#allocation7], %s372
          %374 = dma.done %s370, 256
        $region44: #{patch_embed_forward.2} parent=39 // pred_fallthru
          _
      $region40: #{patch_embed_forward.2} parent=5 // pred_fallthru
        _
    $region6: #{patch_embed_forward.2} parent=1 // loop_footer
      %s18 = sadd.s32 1, %s14
    $region7: #{patch_embed_forward.2} parent=1 // loop_footer_branch
      %13 = sbr.rel target = $region3
    $region8: #{patch_embed_forward.2} parent=1 // loop_exit
      _
    %375 = vsyncpa [#allocation8], 1
    %s376 = scalar_lea.sflag [#allocation8], 1
    %377 = vsyncpa %s376, 1

</llo_original>
